<compile_context>
chip_gen: v7x
topology: tpu7x:2x2x1
jax: 0.10.0
libtpu: 0.0.40
codegen_flags: <defaults>
</compile_context>

<pallas_src>
import functools

import jax
import jax.numpy as jnp
from jax.experimental import pallas as pl
from jax.experimental.pallas import tpu as pltpu

_LANE = 128
_SUBLANE = 8
_MAX_BATCH_TILE = 512


def _round_up(x, m):
    return ((x + m - 1) // m) * m


# --------------------------------------------------------------------------
# Kernel: one agent's full 3-layer MLP on one batch tile.
# Refs (agent axis squeezed away by BlockSpec):
#   x_ref  [TB, in_pad]      w1_ref [in_pad, h_pad]  b1_ref [1, h_pad]
#   w2_ref [h_pad, h_pad]    b2_ref [1, h_pad]
#   w3_ref [h_pad, out_pad]  b3_ref [1, out_pad]     o_ref  [TB, out_pad]
# --------------------------------------------------------------------------
def _mlp_kernel(x_ref, w1_ref, b1_ref, w2_ref, b2_ref, w3_ref, b3_ref, o_ref,
                *, compute_dtype):
    x = x_ref[...].astype(compute_dtype)
    h1 = jnp.dot(x, w1_ref[...].astype(compute_dtype),
                 preferred_element_type=jnp.float32) + b1_ref[...]
    h1 = jnp.maximum(h1, 0.0)
    h2 = jnp.dot(h1.astype(compute_dtype), w2_ref[...].astype(compute_dtype),
                 preferred_element_type=jnp.float32) + b2_ref[...]
    h2 = jnp.maximum(h2, 0.0)
    out = jnp.dot(h2.astype(compute_dtype), w3_ref[...].astype(compute_dtype),
                  preferred_element_type=jnp.float32) + b3_ref[...]
    o_ref[...] = out.astype(o_ref.dtype)


@functools.partial(jax.jit, static_argnames=("compute_dtype",))
def _fused_forward(x, w1, b1, w2, b2, w3, b3, compute_dtype=jnp.float32):
    """x: [A, B_pad, in_pad]; weights stacked per layer; returns [A, B_pad, out_pad]."""
    A, B_pad, in_pad = x.shape
    h1_pad = w1.shape[2]
    h2_pad = w2.shape[2]
    out_pad = w3.shape[2]

    TB = B_pad if B_pad <= _MAX_BATCH_TILE else _MAX_BATCH_TILE
    grid = (A, B_pad // TB)

    sq = pl.Squeezed()
    kernel = functools.partial(_mlp_kernel, compute_dtype=compute_dtype)

    return pl.pallas_call(
        kernel,
        out_shape=jax.ShapeDtypeStruct((A, B_pad, out_pad), jnp.float32),
        grid_spec=pltpu.PrefetchScalarGridSpec(
            num_scalar_prefetch=0,
            grid=grid,
            in_specs=[
                pl.BlockSpec((sq, TB, in_pad), lambda a, b: (a, b, 0)),
                # weight/bias index_maps are constant over the batch axis ->
                # parameters stay VMEM-resident across batch tiles.
                pl.BlockSpec((sq, in_pad, h1_pad), lambda a, b: (a, 0, 0)),
                pl.BlockSpec((sq, 1, h1_pad), lambda a, b: (a, 0, 0)),
                pl.BlockSpec((sq, h1_pad, h2_pad), lambda a, b: (a, 0, 0)),
                pl.BlockSpec((sq, 1, h2_pad), lambda a, b: (a, 0, 0)),
                pl.BlockSpec((sq, h2_pad, out_pad), lambda a, b: (a, 0, 0)),
                pl.BlockSpec((sq, 1, out_pad), lambda a, b: (a, 0, 0)),
            ],
            out_specs=pl.BlockSpec((sq, TB, out_pad), lambda a, b: (a, b, 0)),
        ),
        compiler_params=pltpu.CompilerParams(
            dimension_semantics=("parallel", "parallel"),
            vmem_limit_bytes=64 * 1024 * 1024,
        ),
    )(x, w1, b1, w2, b2, w3, b3)


# --------------------------------------------------------------------------
# Parameter init / packing glue.
# --------------------------------------------------------------------------
def init_multi_agent_fc_network(key, in_sizes, out_sizes, hidden_dims=(64, 64)):
    """Per-agent unpadded params, mirroring nn.Linear's U(-1/sqrt(fan_in), .)."""
    params = []
    for in_size, out_size in zip(in_sizes, out_sizes):
        dims = [in_size, hidden_dims[0], hidden_dims[1], out_size]
        layers = []
        for fan_in, fan_out in zip(dims[:-1], dims[1:]):
            key, kw, kb = jax.random.split(key, 3)
            bound = 1.0 / jnp.sqrt(jnp.float32(fan_in))
            w = jax.random.uniform(kw, (fan_in, fan_out), jnp.float32,
                                   minval=-bound, maxval=bound)
            b = jax.random.uniform(kb, (1, fan_out), jnp.float32,
                                   minval=-bound, maxval=bound)
            layers.append((w, b))
        params.append(layers)
    return params


def pack_params(params):
    """Stack per-agent params into zero-padded, lane-dense [A, ...] slabs."""
    A = len(params)
    in_sizes = tuple(layers[0][0].shape[0] for layers in params)
    out_sizes = tuple(layers[2][0].shape[1] for layers in params)
    h1 = params[0][0][0].shape[1]
    h2 = params[0][1][0].shape[1]

    in_pad = _round_up(max(in_sizes), _LANE)
    h1_pad = _round_up(h1, _LANE)
    h2_pad = _round_up(h2, _LANE)
    out_pad = _round_up(max(out_sizes), _LANE)

    w1 = jnp.zeros((A, in_pad, h1_pad), jnp.float32)
    b1 = jnp.zeros((A, 1, h1_pad), jnp.float32)
    w2 = jnp.zeros((A, h1_pad, h2_pad), jnp.float32)
    b2 = jnp.zeros((A, 1, h2_pad), jnp.float32)
    w3 = jnp.zeros((A, h2_pad, out_pad), jnp.float32)
    b3 = jnp.zeros((A, 1, out_pad), jnp.float32)
    for a, ((W1, B1), (W2, B2), (W3, B3)) in enumerate(params):
        w1 = w1.at[a, :W1.shape[0], :W1.shape[1]].set(W1)
        b1 = b1.at[a, :, :B1.shape[1]].set(B1)
        w2 = w2.at[a, :W2.shape[0], :W2.shape[1]].set(W2)
        b2 = b2.at[a, :, :B2.shape[1]].set(B2)
        w3 = w3.at[a, :W3.shape[0], :W3.shape[1]].set(W3)
        b3 = b3.at[a, :, :B3.shape[1]].set(B3)

    return dict(w1=w1, b1=b1, w2=w2, b2=b2, w3=w3, b3=b3,
                in_sizes=in_sizes, out_sizes=out_sizes)


def multi_agent_fc_forward(packed, inputs, compute_dtype=jnp.float32):
    """Pallas equivalent of MultiAgentFCNetwork.forward: list in -> list out."""
    A = len(packed["in_sizes"])
    assert len(inputs) == A
    in_pad = packed["w1"].shape[1]

    batches = [x.shape[0] for x in inputs]
    B_max = max(batches)
    B_pad = _round_up(B_max, _SUBLANE)
    if B_pad > _MAX_BATCH_TILE:
        B_pad = _round_up(B_pad, _MAX_BATCH_TILE)

    # Zero-padded stacked input slab [A, B_pad, in_pad] (pad cols must be 0
    # so padded weight rows contribute exactly nothing).
    x_stacked = jnp.zeros((A, B_pad, in_pad), jnp.float32)
    for a, x in enumerate(inputs):
        x_stacked = x_stacked.at[a, :x.shape[0], :x.shape[1]].set(
            x.astype(jnp.float32))

    out = _fused_forward(x_stacked, packed["w1"], packed["b1"], packed["w2"],
                         packed["b2"], packed["w3"], packed["b3"],
                         compute_dtype=compute_dtype)
    return [out[a, :batches[a], :packed["out_sizes"][a]] for a in range(A)]


def _reference_forward(params, inputs):
    """Pure-JAX reference for correctness checking."""
    outs = []
    for x, layers in zip(inputs, params):
        h = x
        for i, (w, b) in enumerate(layers):
            h = h @ w + b
            if i < len(layers) - 1:
                h = jnp.maximum(h, 0.0)
        outs.append(h)
    return outs


if __name__ == "__main__":
    key = jax.random.PRNGKey(0)

    # Two agents with different observation / action sizes.
    in_sizes = [16, 12]
    out_sizes = [6, 5]
    hidden_dims = (64, 64)
    batch = 2

    key, kp, kx0, kx1 = jax.random.split(key, 4)
    params = init_multi_agent_fc_network(kp, in_sizes, out_sizes, hidden_dims)
    packed = pack_params(params)
    inputs = [
        jax.random.normal(kx0, (batch, in_sizes[0]), jnp.float32),
        jax.random.normal(kx1, (batch, in_sizes[1]), jnp.float32),
    ]

    # f32 MXU operands for the tight-tolerance check; pass
    # compute_dtype=jnp.bfloat16 on v6e/v7x at large batch for faster matmuls.
    outputs = multi_agent_fc_forward(packed, inputs, compute_dtype=jnp.float32)
    outputs = [jax.block_until_ready(o) for o in outputs]

    refs = _reference_forward(params, inputs)
    for o, r, out_size in zip(outputs, refs, out_sizes):
        assert o.shape == (batch, out_size), o.shape
        assert jnp.allclose(o, r, atol=1e-5, rtol=1e-5), "mismatch vs reference"

    print("KERNEL_OK")
</pallas_src>

<mosaic_0001>
module attributes {stable_mosaic.version = 11 : i64} {
  func.func @_mlp_kernel(%arg0: i32, %arg1: i32, %arg2: memref<1x8x128xf32, #tpu.memory_space<vmem>>, %arg3: memref<1x128x128xf32, #tpu.memory_space<vmem>>, %arg4: memref<1x1x128xf32, #tpu.memory_space<vmem>>, %arg5: memref<1x128x128xf32, #tpu.memory_space<vmem>>, %arg6: memref<1x1x128xf32, #tpu.memory_space<vmem>>, %arg7: memref<1x128x128xf32, #tpu.memory_space<vmem>>, %arg8: memref<1x1x128xf32, #tpu.memory_space<vmem>>, %arg9: memref<1x8x128xf32, #tpu.memory_space<vmem>>) attributes {dimension_semantics = [#tpu.dimension_semantics<parallel>, #tpu.dimension_semantics<parallel>], iteration_bounds = array<i64: 2, 1>, scalar_prefetch = 0 : i64, scratch_operands = 0 : i64, tpu.core_type = #tpu.core_type<tc>, window_params = [{transform_indices = @transform_0, window_bounds = array<i64: 1, 8, 128>}, {transform_indices = @transform_1, window_bounds = array<i64: 1, 128, 128>}, {transform_indices = @transform_2, window_bounds = array<i64: 1, 1, 128>}, {transform_indices = @transform_3, window_bounds = array<i64: 1, 128, 128>}, {transform_indices = @transform_4, window_bounds = array<i64: 1, 1, 128>}, {transform_indices = @transform_5, window_bounds = array<i64: 1, 128, 128>}, {transform_indices = @transform_6, window_bounds = array<i64: 1, 1, 128>}, {transform_indices = @transform_7, window_bounds = array<i64: 1, 8, 128>}]} {
    %c0 = arith.constant 0 : index
    %c0_0 = arith.constant 0 : index
    %c0_1 = arith.constant 0 : index
    %0 = vector.load %arg2[%c0, %c0_0, %c0_1] : memref<1x8x128xf32, #tpu.memory_space<vmem>>, vector<1x8x128xf32>
    %1 = vector.shape_cast %0 : vector<1x8x128xf32> to vector<8x128xf32>
    %c0_2 = arith.constant 0 : index
    %c0_3 = arith.constant 0 : index
    %c0_4 = arith.constant 0 : index
    %2 = vector.load %arg3[%c0_2, %c0_3, %c0_4] : memref<1x128x128xf32, #tpu.memory_space<vmem>>, vector<1x128x128xf32>
    %3 = vector.shape_cast %2 : vector<1x128x128xf32> to vector<128x128xf32>
    %cst = arith.constant dense<0.000000e+00> : vector<8x128xf32>
    %4 = tpu.matmul %1, %3, %cst {dimension_numbers = #tpu.dot_dimension_numbers<[1], [0], [0], [1], [0, 0, 1, 1], [], []>} : vector<8x128xf32>, vector<128x128xf32>, vector<8x128xf32> -> vector<8x128xf32>
    %c0_5 = arith.constant 0 : index
    %c0_6 = arith.constant 0 : index
    %c0_7 = arith.constant 0 : index
    %5 = vector.load %arg4[%c0_5, %c0_6, %c0_7] : memref<1x1x128xf32, #tpu.memory_space<vmem>>, vector<1x1x128xf32>
    %6 = vector.shape_cast %5 : vector<1x1x128xf32> to vector<1x128xf32>
    %7 = vector.broadcast %6 : vector<1x128xf32> to vector<8x128xf32>
    %8 = arith.addf %4, %7 : vector<8x128xf32>
    %cst_8 = arith.constant 0.000000e+00 : f32
    %9 = vector.broadcast %cst_8 : f32 to vector<8x128xf32>
    %10 = arith.maximumf %8, %9 : vector<8x128xf32>
    %c0_9 = arith.constant 0 : index
    %c0_10 = arith.constant 0 : index
    %c0_11 = arith.constant 0 : index
    %11 = vector.load %arg5[%c0_9, %c0_10, %c0_11] : memref<1x128x128xf32, #tpu.memory_space<vmem>>, vector<1x128x128xf32>
    %12 = vector.shape_cast %11 : vector<1x128x128xf32> to vector<128x128xf32>
    %cst_12 = arith.constant dense<0.000000e+00> : vector<8x128xf32>
    %13 = tpu.matmul %10, %12, %cst_12 {dimension_numbers = #tpu.dot_dimension_numbers<[1], [0], [0], [1], [0, 0, 1, 1], [], []>} : vector<8x128xf32>, vector<128x128xf32>, vector<8x128xf32> -> vector<8x128xf32>
    %c0_13 = arith.constant 0 : index
    %c0_14 = arith.constant 0 : index
    %c0_15 = arith.constant 0 : index
    %14 = vector.load %arg6[%c0_13, %c0_14, %c0_15] : memref<1x1x128xf32, #tpu.memory_space<vmem>>, vector<1x1x128xf32>
    %15 = vector.shape_cast %14 : vector<1x1x128xf32> to vector<1x128xf32>
    %16 = vector.broadcast %15 : vector<1x128xf32> to vector<8x128xf32>
    %17 = arith.addf %13, %16 : vector<8x128xf32>
    %cst_16 = arith.constant 0.000000e+00 : f32
    %18 = vector.broadcast %cst_16 : f32 to vector<8x128xf32>
    %19 = arith.maximumf %17, %18 : vector<8x128xf32>
    %c0_17 = arith.constant 0 : index
    %c0_18 = arith.constant 0 : index
    %c0_19 = arith.constant 0 : index
    %20 = vector.load %arg7[%c0_17, %c0_18, %c0_19] : memref<1x128x128xf32, #tpu.memory_space<vmem>>, vector<1x128x128xf32>
    %21 = vector.shape_cast %20 : vector<1x128x128xf32> to vector<128x128xf32>
    %cst_20 = arith.constant dense<0.000000e+00> : vector<8x128xf32>
    %22 = tpu.matmul %19, %21, %cst_20 {dimension_numbers = #tpu.dot_dimension_numbers<[1], [0], [0], [1], [0, 0, 1, 1], [], []>} : vector<8x128xf32>, vector<128x128xf32>, vector<8x128xf32> -> vector<8x128xf32>
    %c0_21 = arith.constant 0 : index
    %c0_22 = arith.constant 0 : index
    %c0_23 = arith.constant 0 : index
    %23 = vector.load %arg8[%c0_21, %c0_22, %c0_23] : memref<1x1x128xf32, #tpu.memory_space<vmem>>, vector<1x1x128xf32>
    %24 = vector.shape_cast %23 : vector<1x1x128xf32> to vector<1x128xf32>
    %25 = vector.broadcast %24 : vector<1x128xf32> to vector<8x128xf32>
    %26 = arith.addf %22, %25 : vector<8x128xf32>
    %c0_24 = arith.constant 0 : index
    %c0_25 = arith.constant 0 : index
    %c0_26 = arith.constant 0 : index
    %27 = vector.load %arg9[%c0_24, %c0_25, %c0_26] : memref<1x8x128xf32, #tpu.memory_space<vmem>>, vector<1x8x128xf32>
    %28 = vector.shape_cast %27 : vector<1x8x128xf32> to vector<8x128xf32>
    %29 = vector.shape_cast %26 : vector<8x128xf32> to vector<1x8x128xf32>
    tpu.vector_store %arg9[%c0_24, %c0_25, %c0_26], %29 {strides = array<i32>} : memref<1x8x128xf32, #tpu.memory_space<vmem>>, vector<1x8x128xf32>,
    return
  }
  func.func @transform_0(%arg0: i32, %arg1: i32) -> (i32, i32, i32) {
    %c0_i32 = arith.constant 0 : i32
    %c0_i32_0 = arith.constant 0 : i32
    return %arg0, %arg1, %c0_i32 : i32, i32, i32
  }
  func.func @transform_1(%arg0: i32, %arg1: i32) -> (i32, i32, i32) {
    %c0_i32 = arith.constant 0 : i32
    %c0_i32_0 = arith.constant 0 : i32
    %c0_i32_1 = arith.constant 0 : i32
    return %arg0, %c0_i32, %c0_i32_0 : i32, i32, i32
  }
  func.func @transform_2(%arg0: i32, %arg1: i32) -> (i32, i32, i32) {
    %c0_i32 = arith.constant 0 : i32
    %c0_i32_0 = arith.constant 0 : i32
    %c0_i32_1 = arith.constant 0 : i32
    return %arg0, %c0_i32, %c0_i32_0 : i32, i32, i32
  }
  func.func @transform_3(%arg0: i32, %arg1: i32) -> (i32, i32, i32) {
    %c0_i32 = arith.constant 0 : i32
    %c0_i32_0 = arith.constant 0 : i32
    %c0_i32_1 = arith.constant 0 : i32
    return %arg0, %c0_i32, %c0_i32_0 : i32, i32, i32
  }
  func.func @transform_4(%arg0: i32, %arg1: i32) -> (i32, i32, i32) {
    %c0_i32 = arith.constant 0 : i32
    %c0_i32_0 = arith.constant 0 : i32
    %c0_i32_1 = arith.constant 0 : i32
    return %arg0, %c0_i32, %c0_i32_0 : i32, i32, i32
  }
  func.func @transform_5(%arg0: i32, %arg1: i32) -> (i32, i32, i32) {
    %c0_i32 = arith.constant 0 : i32
    %c0_i32_0 = arith.constant 0 : i32
    %c0_i32_1 = arith.constant 0 : i32
    return %arg0, %c0_i32, %c0_i32_0 : i32, i32, i32
  }
  func.func @transform_6(%arg0: i32, %arg1: i32) -> (i32, i32, i32) {
    %c0_i32 = arith.constant 0 : i32
    %c0_i32_0 = arith.constant 0 : i32
    %c0_i32_1 = arith.constant 0 : i32
    return %arg0, %c0_i32, %c0_i32_0 : i32, i32, i32
  }
  func.func @transform_7(%arg0: i32, %arg1: i32) -> (i32, i32, i32) {
    %c0_i32 = arith.constant 0 : i32
    %c0_i32_0 = arith.constant 0 : i32
    return %arg0, %arg1, %c0_i32 : i32, i32, i32
  }
}

</mosaic_0001>

<llo_original>
// kernel: _fused_forward.1
$region0: #{_fused_forward.1}
  #allocation0 [shape = 'u32[]', space=smem, size = 0x4, offset = 0x4, fixed_abs, tag = 'smem constant byte address 0x4 - core index']
  #allocation1 [shape = 'u32[144,128]{1,0:T(1,128)}', space=vmem, size = 0x12000, scoped, tag = 'internal scratch']
  %s0 = inlined_call_operand.hbm [shape: f32[2,8,128], index: 0, kind: input, shape index: {}]
  %s1 = inlined_call_operand.hbm [shape: f32[2,128,128], index: 1, kind: input, shape index: {}]
  %s2 = inlined_call_operand.hbm [shape: f32[2,1,128], index: 2, kind: input, shape index: {}]
  %s3 = inlined_call_operand.hbm [shape: f32[2,128,128], index: 3, kind: input, shape index: {}]
  %s4 = inlined_call_operand.hbm [shape: f32[2,1,128], index: 4, kind: input, shape index: {}]
  %s5 = inlined_call_operand.hbm [shape: f32[2,128,128], index: 5, kind: input, shape index: {}]
  %s6 = inlined_call_operand.hbm [shape: f32[2,1,128], index: 6, kind: input, shape index: {}]
  %s7 = inlined_call_operand.hbm [shape: f32[2,8,128], index: 7, kind: output, shape index: {}]
  %s8 = sld [smem:[#allocation0]]
  $region89: #{_fused_forward.1} parent=0
    _
  %s10 = ssub.s32 1, %s8
  %s11 = scalar_select 0, %s10, %s8
  $region1: #{_fused_forward.1} parent=0
    #allocation2 [shape = 'u8[8192]{0}', space=vmem, size = 0x2000, scoped, tag = 'input window, operand 0']
    #allocation3 [shape = 's32[2]{0}', space=sflag, size = 0x8, scoped, tag = 'scoped memory for _fused_forward.1']
    #allocation4 [shape = 's32[2]{0}', space=sflag, size = 0x8, scoped, tag = 'scoped memory for _fused_forward.1']
    #allocation5 [shape = 'u8[131072]{0}', space=vmem, size = 0x20000, scoped, tag = 'input window, operand 1']
    #allocation6 [shape = 's32[2]{0}', space=sflag, size = 0x8, scoped, tag = 'scoped memory for _fused_forward.1']
    #allocation7 [shape = 'u8[1024]{0}', space=vmem, size = 0x400, scoped, tag = 'input window, operand 2']
    #allocation8 [shape = 'u8[131072]{0}', space=vmem, size = 0x20000, scoped, tag = 'input window, operand 3']
    #allocation9 [shape = 's32[2]{0}', space=sflag, size = 0x8, scoped, tag = 'scoped memory for _fused_forward.1']
    #allocation10 [shape = 'u8[1024]{0}', space=vmem, size = 0x400, scoped, tag = 'input window, operand 4']
    #allocation11 [shape = 'u8[131072]{0}', space=vmem, size = 0x20000, scoped, tag = 'input window, operand 5']
    #allocation12 [shape = 's32[2]{0}', space=sflag, size = 0x8, scoped, tag = 'scoped memory for _fused_forward.1']
    #allocation13 [shape = 'u8[1024]{0}', space=vmem, size = 0x400, scoped, tag = 'input window, operand 6']
    #allocation14 [shape = 'u8[8192]{0}', space=vmem, size = 0x2000, scoped, tag = 'output window, operand 0']
    %12 = vsyncpa [#allocation3], 0
    %s13 = scalar_lea.sflag [#allocation3], 1
    %14 = vsyncpa %s13, 0
    %15 = vsyncpa [#allocation6], 0
    %s16 = scalar_lea.sflag [#allocation6], 1
    %17 = vsyncpa %s16, 0
    %18 = vsyncpa [#allocation9], 0
    %s19 = scalar_lea.sflag [#allocation9], 1
    %20 = vsyncpa %s19, 0
    %21 = vsyncpa [#allocation12], 0
    %s22 = scalar_lea.sflag [#allocation12], 1
    %23 = vsyncpa %s22, 0
    %24 = vsyncpa [#allocation4], 0
    %s25 = scalar_lea.sflag [#allocation4], 1
    %26 = vsyncpa %s25, 0
    loop: start=0, step=1, limit=4
    $region2: #{_fused_forward.1} parent=1 // loop_pre_header
      _
    $region3: #{_fused_forward.1} parent=1 // loop_header
      %s28 = sphi 0, %s32
      %p29 = scmp.ge.s32.totalorder %s28, 4
      %s35 = sphi 0, %s47
      %s36 = sphi 0, %s43
      %s37 = sphi 0, %s35
      %s38 = sphi 0, %s36
      %s39 = sphi 0, %s37
      %s40 = sphi 0, %s38
      %s52 = sphi 0, %s54
      %s55 = sphi 0, %s52
      %s56 = sphi 0, %s55
      %s72 = sphi 0, %s56
      %s78 = sphi 0, %s80
      %s81 = sphi 0, %s78
      %s82 = sphi 0, %s81
      %s98 = sphi 0, %s82
      %s104 = sphi 0, %s106
      %s107 = sphi 0, %s104
      %s108 = sphi 0, %s107
      %s124 = sphi 0, %s108
      %s130 = sphi 0, %s132
      %s133 = sphi 0, %s130
      %s134 = sphi 0, %s133
      %s150 = sphi 0, %s134
      %s156 = sphi 0, %s158
      %s159 = sphi 0, %s156
      %s160 = sphi 0, %s159
      %s176 = sphi 0, %s160
      %s182 = sphi 0, %s184
      %s185 = sphi 0, %s182
      %s186 = sphi 0, %s185
      %s202 = sphi 0, %s186
      %s208 = sphi 0, %s210
      %s211 = sphi 0, %s208
      %s212 = sphi 0, %s211
      %s228 = sphi 0, %s212
      %s236 = sphi 0, %s238
      %s239 = sphi 0, %s236
      %s240 = sphi 0, %s239
      %s256 = sphi 0, %s240
    $region4: #{_fused_forward.1} parent=1 // loop_header_branch
      %31 = sbr.rel (%p29) target = $region8
    $region5: #{_fused_forward.1} parent=1 // loop_body
      %s33 = ssub.s32 %s28, 1
      %s34 = ssub.s32 %s28, 2
      %s41 = sadd.s32 1, %s36
      %p42 = scmp.ge.s32.totalorder %s41, 1
      %s43 = scalar_select %p42, 0, %s41
      %s44 = sadd.s32 1, %s35
      %s45 = scalar_select %p42, %s44, %s35
      %p46 = scmp.ge.s32.totalorder %s45, 2
      %s47 = scalar_select %p46, 0, %s45
      %s48 = ssub.s32 %s35, %s47
      %s49 = ssub.s32 %s36, %s43
      %s50 = sor.u32 %s48, %s49
      %p51 = scmp.eq.s32.totalorder %s50, 0
      %s53 = sadd.s32 %s52, 1
      %s54 = scalar_select %p51, %s52, %s53
      %p57 = pneg %p51
      %p58 = scmp.eq.s32.totalorder %s28, 1
      %p59 = por %p57, %p58
      %p60 = scmp.ne.s32.totalorder %s52, %s55
      %p61 = scmp.eq.s32.totalorder %s28, 0
      %p62 = por %p60, %p61
      %p63 = scmp.ne.s32.totalorder %s52, %s55
      %p64 = scmp.eq.s32.totalorder %s33, 1
      %p65 = por %p63, %p64
      %p66 = scmp.ne.s32.totalorder %s55, %s56
      %p67 = scmp.eq.s32.totalorder %s33, 0
      %p68 = por %p66, %p67
      %p69 = scmp.ne.s32.totalorder %s55, %s56
      %p70 = scmp.eq.s32.totalorder %s34, 1
      %p71 = por %p69, %p70
      %p73 = scmp.ne.s32.totalorder %s56, %s72
      %p74 = scmp.eq.s32.totalorder %s34, 0
      %p75 = por %p73, %p74
      %s76 = ssub.s32 %s35, %s47
      %p77 = scmp.eq.s32.totalorder %s76, 0
      %s79 = sadd.s32 %s78, 1
      %s80 = scalar_select %p77, %s78, %s79
      %p83 = pneg %p77
      %p84 = scmp.eq.s32.totalorder %s28, 1
      %p85 = por %p83, %p84
      %p86 = scmp.ne.s32.totalorder %s78, %s81
      %p87 = scmp.eq.s32.totalorder %s28, 0
      %p88 = por %p86, %p87
      %p89 = scmp.ne.s32.totalorder %s78, %s81
      %p90 = scmp.eq.s32.totalorder %s33, 1
      %p91 = por %p89, %p90
      %p92 = scmp.ne.s32.totalorder %s81, %s82
      %p93 = scmp.eq.s32.totalorder %s33, 0
      %p94 = por %p92, %p93
      %p95 = scmp.ne.s32.totalorder %s81, %s82
      %p96 = scmp.eq.s32.totalorder %s34, 1
      %p97 = por %p95, %p96
      %p99 = scmp.ne.s32.totalorder %s82, %s98
      %p100 = scmp.eq.s32.totalorder %s34, 0
      %p101 = por %p99, %p100
      %s102 = ssub.s32 %s35, %s47
      %p103 = scmp.eq.s32.totalorder %s102, 0
      %s105 = sadd.s32 %s104, 1
      %s106 = scalar_select %p103, %s104, %s105
      %p109 = pneg %p103
      %p110 = scmp.eq.s32.totalorder %s28, 1
      %p111 = por %p109, %p110
      %p112 = scmp.ne.s32.totalorder %s104, %s107
      %p113 = scmp.eq.s32.totalorder %s28, 0
      %p114 = por %p112, %p113
      %p115 = scmp.ne.s32.totalorder %s104, %s107
      %p116 = scmp.eq.s32.totalorder %s33, 1
      %p117 = por %p115, %p116
      %p118 = scmp.ne.s32.totalorder %s107, %s108
      %p119 = scmp.eq.s32.totalorder %s33, 0
      %p120 = por %p118, %p119
      %p121 = scmp.ne.s32.totalorder %s107, %s108
      %p122 = scmp.eq.s32.totalorder %s34, 1
      %p123 = por %p121, %p122
      %p125 = scmp.ne.s32.totalorder %s108, %s124
      %p126 = scmp.eq.s32.totalorder %s34, 0
      %p127 = por %p125, %p126
      %s128 = ssub.s32 %s35, %s47
      %p129 = scmp.eq.s32.totalorder %s128, 0
      %s131 = sadd.s32 %s130, 1
      %s132 = scalar_select %p129, %s130, %s131
      %p135 = pneg %p129
      %p136 = scmp.eq.s32.totalorder %s28, 1
      %p137 = por %p135, %p136
      %p138 = scmp.ne.s32.totalorder %s130, %s133
      %p139 = scmp.eq.s32.totalorder %s28, 0
      %p140 = por %p138, %p139
      %p141 = scmp.ne.s32.totalorder %s130, %s133
      %p142 = scmp.eq.s32.totalorder %s33, 1
      %p143 = por %p141, %p142
      %p144 = scmp.ne.s32.totalorder %s133, %s134
      %p145 = scmp.eq.s32.totalorder %s33, 0
      %p146 = por %p144, %p145
      %p147 = scmp.ne.s32.totalorder %s133, %s134
      %p148 = scmp.eq.s32.totalorder %s34, 1
      %p149 = por %p147, %p148
      %p151 = scmp.ne.s32.totalorder %s134, %s150
      %p152 = scmp.eq.s32.totalorder %s34, 0
      %p153 = por %p151, %p152
      %s154 = ssub.s32 %s35, %s47
      %p155 = scmp.eq.s32.totalorder %s154, 0
      %s157 = sadd.s32 %s156, 1
      %s158 = scalar_select %p155, %s156, %s157
      %p161 = pneg %p155
      %p162 = scmp.eq.s32.totalorder %s28, 1
      %p163 = por %p161, %p162
      %p164 = scmp.ne.s32.totalorder %s156, %s159
      %p165 = scmp.eq.s32.totalorder %s28, 0
      %p166 = por %p164, %p165
      %p167 = scmp.ne.s32.totalorder %s156, %s159
      %p168 = scmp.eq.s32.totalorder %s33, 1
      %p169 = por %p167, %p168
      %p170 = scmp.ne.s32.totalorder %s159, %s160
      %p171 = scmp.eq.s32.totalorder %s33, 0
      %p172 = por %p170, %p171
      %p173 = scmp.ne.s32.totalorder %s159, %s160
      %p174 = scmp.eq.s32.totalorder %s34, 1
      %p175 = por %p173, %p174
      %p177 = scmp.ne.s32.totalorder %s160, %s176
      %p178 = scmp.eq.s32.totalorder %s34, 0
      %p179 = por %p177, %p178
      %s180 = ssub.s32 %s35, %s47
      %p181 = scmp.eq.s32.totalorder %s180, 0
      %s183 = sadd.s32 %s182, 1
      %s184 = scalar_select %p181, %s182, %s183
      %p187 = pneg %p181
      %p188 = scmp.eq.s32.totalorder %s28, 1
      %p189 = por %p187, %p188
      %p190 = scmp.ne.s32.totalorder %s182, %s185
      %p191 = scmp.eq.s32.totalorder %s28, 0
      %p192 = por %p190, %p191
      %p193 = scmp.ne.s32.totalorder %s182, %s185
      %p194 = scmp.eq.s32.totalorder %s33, 1
      %p195 = por %p193, %p194
      %p196 = scmp.ne.s32.totalorder %s185, %s186
      %p197 = scmp.eq.s32.totalorder %s33, 0
      %p198 = por %p196, %p197
      %p199 = scmp.ne.s32.totalorder %s185, %s186
      %p200 = scmp.eq.s32.totalorder %s34, 1
      %p201 = por %p199, %p200
      %p203 = scmp.ne.s32.totalorder %s186, %s202
      %p204 = scmp.eq.s32.totalorder %s34, 0
      %p205 = por %p203, %p204
      %s206 = ssub.s32 %s35, %s47
      %p207 = scmp.eq.s32.totalorder %s206, 0
      %s209 = sadd.s32 %s208, 1
      %s210 = scalar_select %p207, %s208, %s209
      %p213 = pneg %p207
      %p214 = scmp.eq.s32.totalorder %s28, 1
      %p215 = por %p213, %p214
      %p216 = scmp.ne.s32.totalorder %s208, %s211
      %p217 = scmp.eq.s32.totalorder %s28, 0
      %p218 = por %p216, %p217
      %p219 = scmp.ne.s32.totalorder %s208, %s211
      %p220 = scmp.eq.s32.totalorder %s33, 1
      %p221 = por %p219, %p220
      %p222 = scmp.ne.s32.totalorder %s211, %s212
      %p223 = scmp.eq.s32.totalorder %s33, 0
      %p224 = por %p222, %p223
      %p225 = scmp.ne.s32.totalorder %s211, %s212
      %p226 = scmp.eq.s32.totalorder %s34, 1
      %p227 = por %p225, %p226
      %p229 = scmp.ne.s32.totalorder %s212, %s228
      %p230 = scmp.eq.s32.totalorder %s34, 0
      %p231 = por %p229, %p230
      %s232 = ssub.s32 %s35, %s47
      %s233 = ssub.s32 %s36, %s43
      %s234 = sor.u32 %s232, %s233
      %p235 = scmp.eq.s32.totalorder %s234, 0
      %s237 = sadd.s32 %s236, 1
      %s238 = scalar_select %p235, %s236, %s237
      %p241 = pneg %p235
      %p242 = scmp.eq.s32.totalorder %s28, 1
      %p243 = por %p241, %p242
      %p244 = scmp.ne.s32.totalorder %s236, %s239
      %p245 = scmp.eq.s32.totalorder %s28, 0
      %p246 = por %p244, %p245
      %p247 = scmp.ne.s32.totalorder %s236, %s239
      %p248 = scmp.eq.s32.totalorder %s33, 1
      %p249 = por %p247, %p248
      %p250 = scmp.ne.s32.totalorder %s239, %s240
      %p251 = scmp.eq.s32.totalorder %s33, 0
      %p252 = por %p250, %p251
      %p253 = scmp.ne.s32.totalorder %s239, %s240
      %p254 = scmp.eq.s32.totalorder %s34, 1
      %p255 = por %p253, %p254
      %p257 = scmp.ne.s32.totalorder %s240, %s256
      %p258 = scmp.eq.s32.totalorder %s34, 0
      %p259 = por %p257, %p258
      %p260 = scmp.le.s32.totalorder 1, %s28
      %p261 = scmp.lt.s32.totalorder %s28, 3
      %p262 = pnand %p260, %p261
      %p263 = pneg %p262
      // Predicated region
      $region9: #{_fused_forward.1} parent=5 // pred_check
        _
      $region10: #{_fused_forward.1} parent=5 // pred_check_branch
        %265 = sbr.rel (%p262) target = $region12
      $region11: #{_fused_forward.1} parent=5 // pred_region
        %s266 = ssub.s32 %s28, 1
      $region12: #{_fused_forward.1} parent=5 // pred_fallthru
        _
      %p267 = scmp.lt.s32.totalorder %s28, 2
      // Predicated region
      $region13: #{_fused_forward.1} parent=5 // pred_check
        %p268 = pneg %p267
      $region14: #{_fused_forward.1} parent=5 // pred_check_branch
        %270 = sbr.rel (%p268) target = $region16
      $region15: #{_fused_forward.1} parent=5 // pred_region
        // Predicated region
        $region17: #{_fused_forward.1} parent=15 // pred_check
          %p271 = pneg %p62
        $region18: #{_fused_forward.1} parent=15 // pred_check_branch
          %273 = sbr.rel (%p271) target = $region20
        $region19: #{_fused_forward.1} parent=15 // pred_region
          %s274 = sand.u32 %s52, 1
          %s275 = scalar_lea.sflag [#allocation3], %s274
          %s276 = sand.u32 %s52, 1
          %s277 = smul.addr %s276, 8
          %s278 = scalar_lea.vmem [#allocation2], %s277
          %s280 = ssub.s32 128, 128
          %281 = vsyncadd %s275, %s280
          %s282 = sadd.s32 %s36, %s35
          %s283 = smul.addr %s282, 128
          %s284 = scalar_lea.hbm %s0, %s283
          %s286 = sshll.u32 %s278, 4
          %s287 = int_to_ptr.vmem [resolvable:$true] %s286
          %289 = dma.hbm_to_vmem [thread:$0]  %s284, 128, %s287, %s275
        $region20: #{_fused_forward.1} parent=15 // pred_fallthru
          _
        // Predicated region
        $region21: #{_fused_forward.1} parent=15 // pred_check
          %p290 = pneg %p88
        $region22: #{_fused_forward.1} parent=15 // pred_check_branch
          %292 = sbr.rel (%p290) target = $region24
        $region23: #{_fused_forward.1} parent=15 // pred_region
          %s293 = sand.u32 %s28, 1
          %s294 = scalar_lea.sflag [#allocation6], %s293
          %s295 = sand.u32 %s78, 1
          %s296 = smul.addr %s295, 128
          %s297 = scalar_lea.vmem [#allocation5], %s296
          %s299 = ssub.s32 2048, 2048
          %300 = vsyncadd %s294, %s299
          %s301 = smul.addr %s35, 16
          %s302 = smul.addr %s301, 128
          %s303 = scalar_lea.hbm %s1, %s302
          %s304 = sshll.u32 %s297, 4
          %s305 = int_to_ptr.vmem [resolvable:$true] %s304
          %310 = dma.hbm_to_vmem [thread:$0]  %s303, 2048, %s305, %s294, 128, 128, 8
        $region24: #{_fused_forward.1} parent=15 // pred_fallthru
          _
        // Predicated region
        $region25: #{_fused_forward.1} parent=15 // pred_check
          %p311 = pneg %p114
        $region26: #{_fused_forward.1} parent=15 // pred_check_branch
          %313 = sbr.rel (%p311) target = $region28
        $region27: #{_fused_forward.1} parent=15 // pred_region
          %s314 = sand.u32 %s28, 1
          %s315 = scalar_lea.sflag [#allocation6], %s314
          %s316 = sand.u32 %s104, 1
          %s317 = scalar_lea.vmem [#allocation7], %s316
          %s319 = ssub.s32 16, 16
          %320 = vsyncadd %s315, %s319
          %s321 = smul.addr %s35, 16
          %s322 = scalar_lea.hbm %s2, %s321
          %s324 = sshll.u32 %s317, 4
          %s325 = int_to_ptr.vmem [resolvable:$true] %s324
          %327 = dma.hbm_to_vmem [thread:$0]  %s322, 16, %s325, %s315
        $region28: #{_fused_forward.1} parent=15 // pred_fallthru
          _
        // Predicated region
        $region29: #{_fused_forward.1} parent=15 // pred_check
          %p328 = pneg %p140
        $region30: #{_fused_forward.1} parent=15 // pred_check_branch
          %330 = sbr.rel (%p328) target = $region32
        $region31: #{_fused_forward.1} parent=15 // pred_region
          %s331 = sand.u32 %s28, 1
          %s332 = scalar_lea.sflag [#allocation9], %s331
          %s333 = sand.u32 %s130, 1
          %s334 = smul.addr %s333, 128
          %s335 = scalar_lea.vmem [#allocation8], %s334
          %s337 = ssub.s32 2048, 2048
          %338 = vsyncadd %s332, %s337
          %s339 = smul.addr %s35, 16
          %s340 = smul.addr %s339, 128
          %s341 = scalar_lea.hbm %s3, %s340
          %s342 = sshll.u32 %s335, 4
          %s343 = int_to_ptr.vmem [resolvable:$true] %s342
          %348 = dma.hbm_to_vmem [thread:$0]  %s341, 2048, %s343, %s332, 128, 128, 8
        $region32: #{_fused_forward.1} parent=15 // pred_fallthru
          _
        // Predicated region
        $region33: #{_fused_forward.1} parent=15 // pred_check
          %p349 = pneg %p166
        $region34: #{_fused_forward.1} parent=15 // pred_check_branch
          %351 = sbr.rel (%p349) target = $region36
        $region35: #{_fused_forward.1} parent=15 // pred_region
          %s352 = sand.u32 %s28, 1
          %s353 = scalar_lea.sflag [#allocation9], %s352
          %s354 = sand.u32 %s156, 1
          %s355 = scalar_lea.vmem [#allocation10], %s354
          %s357 = ssub.s32 16, 16
          %358 = vsyncadd %s353, %s357
          %s359 = smul.addr %s35, 16
          %s360 = scalar_lea.hbm %s4, %s359
          %s362 = sshll.u32 %s355, 4
          %s363 = int_to_ptr.vmem [resolvable:$true] %s362
          %365 = dma.hbm_to_vmem [thread:$0]  %s360, 16, %s363, %s353
        $region36: #{_fused_forward.1} parent=15 // pred_fallthru
          _
        // Predicated region
        $region37: #{_fused_forward.1} parent=15 // pred_check
          %p366 = pneg %p192
        $region38: #{_fused_forward.1} parent=15 // pred_check_branch
          %368 = sbr.rel (%p366) target = $region40
        $region39: #{_fused_forward.1} parent=15 // pred_region
          %s369 = sand.u32 %s28, 1
          %s370 = scalar_lea.sflag [#allocation12], %s369
          %s371 = sand.u32 %s182, 1
          %s372 = smul.addr %s371, 128
          %s373 = scalar_lea.vmem [#allocation11], %s372
          %s375 = ssub.s32 2048, 2048
          %376 = vsyncadd %s370, %s375
          %s377 = smul.addr %s35, 16
          %s378 = smul.addr %s377, 128
          %s379 = scalar_lea.hbm %s5, %s378
          %s380 = sshll.u32 %s373, 4
          %s381 = int_to_ptr.vmem [resolvable:$true] %s380
          %386 = dma.hbm_to_vmem [thread:$0]  %s379, 2048, %s381, %s370, 128, 128, 8
        $region40: #{_fused_forward.1} parent=15 // pred_fallthru
          _
        // Predicated region
        $region41: #{_fused_forward.1} parent=15 // pred_check
          %p387 = pneg %p218
        $region42: #{_fused_forward.1} parent=15 // pred_check_branch
          %389 = sbr.rel (%p387) target = $region44
        $region43: #{_fused_forward.1} parent=15 // pred_region
          %s390 = sand.u32 %s28, 1
          %s391 = scalar_lea.sflag [#allocation12], %s390
          %s392 = sand.u32 %s208, 1
          %s393 = scalar_lea.vmem [#allocation13], %s392
          %s395 = ssub.s32 16, 16
          %396 = vsyncadd %s391, %s395
          %s397 = smul.addr %s35, 16
          %s398 = scalar_lea.hbm %s6, %s397
          %s400 = sshll.u32 %s393, 4
          %s401 = int_to_ptr.vmem [resolvable:$true] %s400
          %403 = dma.hbm_to_vmem [thread:$0]  %s398, 16, %s401, %s391
        $region44: #{_fused_forward.1} parent=15 // pred_fallthru
          _
      $region16: #{_fused_forward.1} parent=5 // pred_fallthru
        _
      %p404 = scmp.le.s32.totalorder 1, %s28
      %p405 = scmp.lt.s32.totalorder %s28, 3
      %p406 = pnand %p404, %p405
      %p407 = pneg %p406
      // Predicated region
      $region45: #{_fused_forward.1} parent=5 // pred_check
        _
      $region46: #{_fused_forward.1} parent=5 // pred_check_branch
        %409 = sbr.rel (%p406) target = $region48
      $region47: #{_fused_forward.1} parent=5 // pred_region
        %s410 = ssub.s32 %s28, 1
        %s411 = sand.u32 %s55, 1
        %s412 = scalar_lea.sflag [#allocation3], %s411
        %s413 = sand.u32 %s55, 1
        %s414 = smul.addr %s413, 8
        %s415 = scalar_lea.vmem [#allocation2], %s414
        // Predicated region
        $region49: #{_fused_forward.1} parent=47 // pred_check
          %p416 = pneg %p68
        $region50: #{_fused_forward.1} parent=47 // pred_check_branch
          %418 = sbr.rel (%p416) target = $region52
        $region51: #{_fused_forward.1} parent=47 // pred_region
          %419 = dma.done %s412, 128
        $region52: #{_fused_forward.1} parent=47 // pred_fallthru
          _
        %s420 = sand.u32 %s33, 1
        %s421 = scalar_lea.sflag [#allocation6], %s420
        %s422 = sand.u32 %s81, 1
        %s423 = smul.addr %s422, 128
        %s424 = scalar_lea.vmem [#allocation5], %s423
        // Predicated region
        $region53: #{_fused_forward.1} parent=47 // pred_check
          %p425 = pneg %p94
        $region54: #{_fused_forward.1} parent=47 // pred_check_branch
          %427 = sbr.rel (%p425) target = $region56
        $region55: #{_fused_forward.1} parent=47 // pred_region
          %428 = dma.done %s421, 2048
        $region56: #{_fused_forward.1} parent=47 // pred_fallthru
          _
        %s429 = sand.u32 %s33, 1
        %s430 = scalar_lea.sflag [#allocation6], %s429
        %s431 = sand.u32 %s107, 1
        %s432 = scalar_lea.vmem [#allocation7], %s431
        // Predicated region
        $region57: #{_fused_forward.1} parent=47 // pred_check
          %p433 = pneg %p120
        $region58: #{_fused_forward.1} parent=47 // pred_check_branch
          %435 = sbr.rel (%p433) target = $region60
        $region59: #{_fused_forward.1} parent=47 // pred_region
          %436 = dma.done %s430, 16
        $region60: #{_fused_forward.1} parent=47 // pred_fallthru
          _
        %s437 = sand.u32 %s33, 1
        %s438 = scalar_lea.sflag [#allocation9], %s437
        %s439 = sand.u32 %s133, 1
        %s440 = smul.addr %s439, 128
        %s441 = scalar_lea.vmem [#allocation8], %s440
        // Predicated region
        $region61: #{_fused_forward.1} parent=47 // pred_check
          %p442 = pneg %p146
        $region62: #{_fused_forward.1} parent=47 // pred_check_branch
          %444 = sbr.rel (%p442) target = $region64
        $region63: #{_fused_forward.1} parent=47 // pred_region
          %445 = dma.done %s438, 2048
        $region64: #{_fused_forward.1} parent=47 // pred_fallthru
          _
        %s446 = sand.u32 %s33, 1
        %s447 = scalar_lea.sflag [#allocation9], %s446
        %s448 = sand.u32 %s159, 1
        %s449 = scalar_lea.vmem [#allocation10], %s448
        // Predicated region
        $region65: #{_fused_forward.1} parent=47 // pred_check
          %p450 = pneg %p172
        $region66: #{_fused_forward.1} parent=47 // pred_check_branch
          %452 = sbr.rel (%p450) target = $region68
        $region67: #{_fused_forward.1} parent=47 // pred_region
          %453 = dma.done %s447, 16
        $region68: #{_fused_forward.1} parent=47 // pred_fallthru
          _
        %s454 = sand.u32 %s33, 1
        %s455 = scalar_lea.sflag [#allocation12], %s454
        %s456 = sand.u32 %s185, 1
        %s457 = smul.addr %s456, 128
        %s458 = scalar_lea.vmem [#allocation11], %s457
        // Predicated region
        $region69: #{_fused_forward.1} parent=47 // pred_check
          %p459 = pneg %p198
        $region70: #{_fused_forward.1} parent=47 // pred_check_branch
          %461 = sbr.rel (%p459) target = $region72
        $region71: #{_fused_forward.1} parent=47 // pred_region
          %462 = dma.done %s455, 2048
        $region72: #{_fused_forward.1} parent=47 // pred_fallthru
          _
        %s463 = sand.u32 %s33, 1
        %s464 = scalar_lea.sflag [#allocation12], %s463
        %s465 = sand.u32 %s211, 1
        %s466 = scalar_lea.vmem [#allocation13], %s465
        // Predicated region
        $region73: #{_fused_forward.1} parent=47 // pred_check
          %p467 = pneg %p224
        $region74: #{_fused_forward.1} parent=47 // pred_check_branch
          %469 = sbr.rel (%p467) target = $region76
        $region75: #{_fused_forward.1} parent=47 // pred_region
          %470 = dma.done %s464, 16
        $region76: #{_fused_forward.1} parent=47 // pred_fallthru
          _
        %s471 = sand.u32 %s55, 1
        %s472 = scalar_lea.sflag [#allocation3], %s471
        %s473 = sand.u32 %s55, 1
        %s474 = smul.addr %s473, 8
        %s475 = scalar_lea.vmem [#allocation2], %s474
        %p476 = pneg %p68
        %p477 = pneg %p65
        %s478 = sand.u32 %s33, 1
        %s479 = scalar_lea.sflag [#allocation6], %s478
        %s480 = sand.u32 %s81, 1
        %s481 = smul.addr %s480, 128
        %s482 = scalar_lea.vmem [#allocation5], %s481
        %p483 = pneg %p94
        %p484 = pneg %p91
        %s485 = sand.u32 %s33, 1
        %s486 = scalar_lea.sflag [#allocation6], %s485
        %s487 = sand.u32 %s107, 1
        %s488 = scalar_lea.vmem [#allocation7], %s487
        %p489 = pneg %p120
        %p490 = pneg %p117
        %s491 = sand.u32 %s33, 1
        %s492 = scalar_lea.sflag [#allocation9], %s491
        %s493 = sand.u32 %s133, 1
        %s494 = smul.addr %s493, 128
        %s495 = scalar_lea.vmem [#allocation8], %s494
        %p496 = pneg %p146
        %p497 = pneg %p143
        %s498 = sand.u32 %s33, 1
        %s499 = scalar_lea.sflag [#allocation9], %s498
        %s500 = sand.u32 %s159, 1
        %s501 = scalar_lea.vmem [#allocation10], %s500
        %p502 = pneg %p172
        %p503 = pneg %p169
        %s504 = sand.u32 %s33, 1
        %s505 = scalar_lea.sflag [#allocation12], %s504
        %s506 = sand.u32 %s185, 1
        %s507 = smul.addr %s506, 128
        %s508 = scalar_lea.vmem [#allocation11], %s507
        %p509 = pneg %p198
        %p510 = pneg %p195
        %s511 = sand.u32 %s33, 1
        %s512 = scalar_lea.sflag [#allocation12], %s511
        %s513 = sand.u32 %s211, 1
        %s514 = scalar_lea.vmem [#allocation13], %s513
        %p515 = pneg %p224
        %p516 = pneg %p221
        %p517 = pneg %p252
        %p518 = pneg %p249
        %s519 = sand.u32 %s239, 1
        %s520 = scalar_lea.sflag [#allocation4], %s519
        %s521 = sand.u32 %s239, 1
        %s522 = smul.addr %s521, 8
        %s523 = scalar_lea.vmem [#allocation14], %s522
        %v524 = vld [vmem:[%s415] sm:$0xff]
        %v525 = vld [vmem:[%s424] sm:$0xff]
        %v526 = vld [vmem:[%s424 + $0x8] sm:$0xff]
        %v527 = vld [vmem:[%s424 + $0x10] sm:$0xff]
        %v528 = vld [vmem:[%s424 + $0x18] sm:$0xff]
        %v529 = vld [vmem:[%s424 + $0x20] sm:$0xff]
        %v530 = vld [vmem:[%s424 + $0x28] sm:$0xff]
        %v531 = vld [vmem:[%s424 + $0x30] sm:$0xff]
        %v532 = vld [vmem:[%s424 + $0x38] sm:$0xff]
        %v533 = vld [vmem:[%s424 + $0x40] sm:$0xff]
        %v534 = vld [vmem:[%s424 + $0x48] sm:$0xff]
        %v535 = vld [vmem:[%s424 + $0x50] sm:$0xff]
        %v536 = vld [vmem:[%s424 + $0x58] sm:$0xff]
        %v537 = vld [vmem:[%s424 + $0x60] sm:$0xff]
        %v538 = vld [vmem:[%s424 + $0x68] sm:$0xff]
        %v539 = vld [vmem:[%s424 + $0x70] sm:$0xff]
        %v540 = vld [vmem:[%s424 + $0x78] sm:$0xff]
        %v541 = vld [vmem:[%s432] sm:$0x1]
        %v543 = vlaneseq
        %v544 = vshrl.u32 %v543, 7
        %v545 = vsub.s32 0, %v544
        %v546 = vrot.slane %v541, %v545
        %548 = vmatprep.subr.mxu0 0.0
        %549 = vmatpush1.msra.mxu0 %v525
        %550 = vmatprep.subr.mxu0 0.0
        %551 = vmatpush1.msra.mxu0 %v526
        %552 = vmatprep.subr.mxu0 0.0
        %553 = vmatpush1.msra.mxu0 %v527
        %554 = vmatprep.subr.mxu0 0.0
        %555 = vmatpush1.msra.mxu0 %v528
        %556 = vmatprep.subr.mxu0 0.0
        %557 = vmatpush1.msra.mxu0 %v529
        %558 = vmatprep.subr.mxu0 0.0
        %559 = vmatpush1.msra.mxu0 %v530
        %560 = vmatprep.subr.mxu0 0.0
        %561 = vmatpush1.msra.mxu0 %v531
        %562 = vmatprep.subr.mxu0 0.0
        %563 = vmatpush1.msra.mxu0 %v532
        %564 = vmatprep.subr.mxu0 0.0
        %565 = vmatpush1.msra.mxu0 %v533
        %566 = vmatprep.subr.mxu0 0.0
        %567 = vmatpush1.msra.mxu0 %v534
        %568 = vmatprep.subr.mxu0 0.0
        %569 = vmatpush1.msra.mxu0 %v535
        %570 = vmatprep.subr.mxu0 0.0
        %571 = vmatpush1.msra.mxu0 %v536
        %572 = vmatprep.subr.mxu0 0.0
        %573 = vmatpush1.msra.mxu0 %v537
        %574 = vmatprep.subr.mxu0 0.0
        %575 = vmatpush1.msra.mxu0 %v538
        %576 = vmatprep.subr.mxu0 0.0
        %577 = vmatpush1.msra.mxu0 %v539
        %578 = vmatprep.subr.mxu0 0.0
        %579 = vmatpush1.msra.mxu0 %v540
        %580 = vmatprep.subr.mxu0 0.0
        %581 = vmatpush1.msra.mxu0 0.0
        %582 = vmatprep.subr.mxu0 0.0
        %583 = vmatpush1.msra.mxu0 0.0
        %584 = vmatprep.subr.mxu0 0.0
        %585 = vmatpush1.msra.mxu0 0.0
        %586 = vmatprep.subr.mxu0 0.0
        %587 = vmatpush1.msra.mxu0 0.0
        %588 = vmatprep.subr.mxu0 0.0
        %589 = vmatpush1.msra.mxu0 0.0
        %590 = vmatprep.subr.mxu0 0.0
        %591 = vmatpush1.msra.mxu0 0.0
        %592 = vmatprep.subr.mxu0 0.0
        %593 = vmatpush1.msra.mxu0 0.0
        %594 = vmatprep.subr.mxu0 0.0
        %595 = vmatpush1.msra.mxu0 0.0
        %596 = vmatprep.subr.mxu0 0.0
        %597 = vmatpush1.msra.mxu0 0.0
        %598 = vmatprep.subr.mxu0 0.0
        %599 = vmatpush1.msra.mxu0 0.0
        %600 = vmatprep.subr.mxu0 0.0
        %601 = vmatpush1.msra.mxu0 0.0
        %602 = vmatprep.subr.mxu0 0.0
        %603 = vmatpush1.msra.mxu0 0.0
        %604 = vmatprep.subr.mxu0 0.0
        %605 = vmatpush1.msra.mxu0 0.0
        %606 = vmatprep.subr.mxu0 0.0
        %607 = vmatpush1.msra.mxu0 0.0
        %608 = vmatprep.subr.mxu0 0.0
        %609 = vmatpush1.msra.mxu0 0.0
        %610 = vmatprep.subr.mxu0 0.0
        %611 = vmatpush1.msra.mxu0 0.0
        %612 = vmatprep.mubr.f32.mxu0 0.0
        %613 = vmatmul.mubr.f32.gmra.mrb[0].mxu0 %v524
        %v614 = vpop.f32.mrb[0].mxu0
        %v615 = vadd.f32 %v546, %v614
        %v616 = vpop.f32.mrb[0].mxu0
        %617 = vdwg.mxu0
        %v618 = vmax.f32 %v615, 0.0
        %v619 = vld [vmem:[%s441] sm:$0xff]
        %v620 = vld [vmem:[%s441 + $0x8] sm:$0xff]
        %v621 = vld [vmem:[%s441 + $0x10] sm:$0xff]
        %v622 = vld [vmem:[%s441 + $0x18] sm:$0xff]
        %v623 = vld [vmem:[%s441 + $0x20] sm:$0xff]
        %v624 = vld [vmem:[%s441 + $0x28] sm:$0xff]
        %v625 = vld [vmem:[%s441 + $0x30] sm:$0xff]
        %v626 = vld [vmem:[%s441 + $0x38] sm:$0xff]
        %v627 = vld [vmem:[%s441 + $0x40] sm:$0xff]
        %v628 = vld [vmem:[%s441 + $0x48] sm:$0xff]
        %v629 = vld [vmem:[%s441 + $0x50] sm:$0xff]
        %v630 = vld [vmem:[%s441 + $0x58] sm:$0xff]
        %v631 = vld [vmem:[%s441 + $0x60] sm:$0xff]
        %v632 = vld [vmem:[%s441 + $0x68] sm:$0xff]
        %v633 = vld [vmem:[%s441 + $0x70] sm:$0xff]
        %v634 = vld [vmem:[%s441 + $0x78] sm:$0xff]
        %v635 = vld [vmem:[%s449] sm:$0x1]
        %v637 = vlaneseq
        %v638 = vshrl.u32 %v637, 7
        %v639 = vsub.s32 0, %v638
        %v640 = vrot.slane %v635, %v639
        %642 = vmatprep.subr.mxu0 0.0
        %643 = vmatpush1.msra.mxu0 %v619
        %644 = vmatprep.subr.mxu0 0.0
        %645 = vmatpush1.msra.mxu0 %v620
        %646 = vmatprep.subr.mxu0 0.0
        %647 = vmatpush1.msra.mxu0 %v621
        %648 = vmatprep.subr.mxu0 0.0
        %649 = vmatpush1.msra.mxu0 %v622
        %650 = vmatprep.subr.mxu0 0.0
        %651 = vmatpush1.msra.mxu0 %v623
        %652 = vmatprep.subr.mxu0 0.0
        %653 = vmatpush1.msra.mxu0 %v624
        %654 = vmatprep.subr.mxu0 0.0
        %655 = vmatpush1.msra.mxu0 %v625
        %656 = vmatprep.subr.mxu0 0.0
        %657 = vmatpush1.msra.mxu0 %v626
        %658 = vmatprep.subr.mxu0 0.0
        %659 = vmatpush1.msra.mxu0 %v627
        %660 = vmatprep.subr.mxu0 0.0
        %661 = vmatpush1.msra.mxu0 %v628
        %662 = vmatprep.subr.mxu0 0.0
        %663 = vmatpush1.msra.mxu0 %v629
        %664 = vmatprep.subr.mxu0 0.0
        %665 = vmatpush1.msra.mxu0 %v630
        %666 = vmatprep.subr.mxu0 0.0
        %667 = vmatpush1.msra.mxu0 %v631
        %668 = vmatprep.subr.mxu0 0.0
        %669 = vmatpush1.msra.mxu0 %v632
        %670 = vmatprep.subr.mxu0 0.0
        %671 = vmatpush1.msra.mxu0 %v633
        %672 = vmatprep.subr.mxu0 0.0
        %673 = vmatpush1.msra.mxu0 %v634
        %674 = vmatprep.subr.mxu0 0.0
        %675 = vmatpush1.msra.mxu0 0.0
        %676 = vmatprep.subr.mxu0 0.0
        %677 = vmatpush1.msra.mxu0 0.0
        %678 = vmatprep.subr.mxu0 0.0
        %679 = vmatpush1.msra.mxu0 0.0
        %680 = vmatprep.subr.mxu0 0.0
        %681 = vmatpush1.msra.mxu0 0.0
        %682 = vmatprep.subr.mxu0 0.0
        %683 = vmatpush1.msra.mxu0 0.0
        %684 = vmatprep.subr.mxu0 0.0
        %685 = vmatpush1.msra.mxu0 0.0
        %686 = vmatprep.subr.mxu0 0.0
        %687 = vmatpush1.msra.mxu0 0.0
        %688 = vmatprep.subr.mxu0 0.0
        %689 = vmatpush1.msra.mxu0 0.0
        %690 = vmatprep.subr.mxu0 0.0
        %691 = vmatpush1.msra.mxu0 0.0
        %692 = vmatprep.subr.mxu0 0.0
        %693 = vmatpush1.msra.mxu0 0.0
        %694 = vmatprep.subr.mxu0 0.0
        %695 = vmatpush1.msra.mxu0 0.0
        %696 = vmatprep.subr.mxu0 0.0
        %697 = vmatpush1.msra.mxu0 0.0
        %698 = vmatprep.subr.mxu0 0.0
        %699 = vmatpush1.msra.mxu0 0.0
        %700 = vmatprep.subr.mxu0 0.0
        %701 = vmatpush1.msra.mxu0 0.0
        %702 = vmatprep.subr.mxu0 0.0
        %703 = vmatpush1.msra.mxu0 0.0
        %704 = vmatprep.subr.mxu0 0.0
        %705 = vmatpush1.msra.mxu0 0.0
        %706 = vmatprep.mubr.f32.mxu0 0.0
        %707 = vmatmul.mubr.f32.gmra.mrb[0].mxu0 %v618
        %v708 = vpop.f32.mrb[0].mxu0
        %v709 = vadd.f32 %v640, %v708
        %v710 = vpop.f32.mrb[0].mxu0
        %711 = vdwg.mxu0
        %v712 = vmax.f32 %v709, 0.0
        %v713 = vld [vmem:[%s458] sm:$0xff]
        %v714 = vld [vmem:[%s458 + $0x8] sm:$0xff]
        %v715 = vld [vmem:[%s458 + $0x10] sm:$0xff]
        %v716 = vld [vmem:[%s458 + $0x18] sm:$0xff]
        %v717 = vld [vmem:[%s458 + $0x20] sm:$0xff]
        %v718 = vld [vmem:[%s458 + $0x28] sm:$0xff]
        %v719 = vld [vmem:[%s458 + $0x30] sm:$0xff]
        %v720 = vld [vmem:[%s458 + $0x38] sm:$0xff]
        %v721 = vld [vmem:[%s458 + $0x40] sm:$0xff]
        %v722 = vld [vmem:[%s458 + $0x48] sm:$0xff]
        %v723 = vld [vmem:[%s458 + $0x50] sm:$0xff]
        %v724 = vld [vmem:[%s458 + $0x58] sm:$0xff]
        %v725 = vld [vmem:[%s458 + $0x60] sm:$0xff]
        %v726 = vld [vmem:[%s458 + $0x68] sm:$0xff]
        %v727 = vld [vmem:[%s458 + $0x70] sm:$0xff]
        %v728 = vld [vmem:[%s458 + $0x78] sm:$0xff]
        %v729 = vld [vmem:[%s466] sm:$0x1]
        %v731 = vlaneseq
        %v732 = vshrl.u32 %v731, 7
        %v733 = vsub.s32 0, %v732
        %v734 = vrot.slane %v729, %v733
        %736 = vmatprep.subr.mxu0 0.0
        %737 = vmatpush1.msra.mxu0 %v713
        %738 = vmatprep.subr.mxu0 0.0
        %739 = vmatpush1.msra.mxu0 %v714
        %740 = vmatprep.subr.mxu0 0.0
        %741 = vmatpush1.msra.mxu0 %v715
        %742 = vmatprep.subr.mxu0 0.0
        %743 = vmatpush1.msra.mxu0 %v716
        %744 = vmatprep.subr.mxu0 0.0
        %745 = vmatpush1.msra.mxu0 %v717
        %746 = vmatprep.subr.mxu0 0.0
        %747 = vmatpush1.msra.mxu0 %v718
        %748 = vmatprep.subr.mxu0 0.0
        %749 = vmatpush1.msra.mxu0 %v719
        %750 = vmatprep.subr.mxu0 0.0
        %751 = vmatpush1.msra.mxu0 %v720
        %752 = vmatprep.subr.mxu0 0.0
        %753 = vmatpush1.msra.mxu0 %v721
        %754 = vmatprep.subr.mxu0 0.0
        %755 = vmatpush1.msra.mxu0 %v722
        %756 = vmatprep.subr.mxu0 0.0
        %757 = vmatpush1.msra.mxu0 %v723
        %758 = vmatprep.subr.mxu0 0.0
        %759 = vmatpush1.msra.mxu0 %v724
        %760 = vmatprep.subr.mxu0 0.0
        %761 = vmatpush1.msra.mxu0 %v725
        %762 = vmatprep.subr.mxu0 0.0
        %763 = vmatpush1.msra.mxu0 %v726
        %764 = vmatprep.subr.mxu0 0.0
        %765 = vmatpush1.msra.mxu0 %v727
        %766 = vmatprep.subr.mxu0 0.0
        %767 = vmatpush1.msra.mxu0 %v728
        %768 = vmatprep.subr.mxu0 0.0
        %769 = vmatpush1.msra.mxu0 0.0
        %770 = vmatprep.subr.mxu0 0.0
        %771 = vmatpush1.msra.mxu0 0.0
        %772 = vmatprep.subr.mxu0 0.0
        %773 = vmatpush1.msra.mxu0 0.0
        %774 = vmatprep.subr.mxu0 0.0
        %775 = vmatpush1.msra.mxu0 0.0
        %776 = vmatprep.subr.mxu0 0.0
        %777 = vmatpush1.msra.mxu0 0.0
        %778 = vmatprep.subr.mxu0 0.0
        %779 = vmatpush1.msra.mxu0 0.0
        %780 = vmatprep.subr.mxu0 0.0
        %781 = vmatpush1.msra.mxu0 0.0
        %782 = vmatprep.subr.mxu0 0.0
        %783 = vmatpush1.msra.mxu0 0.0
        %784 = vmatprep.subr.mxu0 0.0
        %785 = vmatpush1.msra.mxu0 0.0
        %786 = vmatprep.subr.mxu0 0.0
        %787 = vmatpush1.msra.mxu0 0.0
        %788 = vmatprep.subr.mxu0 0.0
        %789 = vmatpush1.msra.mxu0 0.0
        %790 = vmatprep.subr.mxu0 0.0
        %791 = vmatpush1.msra.mxu0 0.0
        %792 = vmatprep.subr.mxu0 0.0
        %793 = vmatpush1.msra.mxu0 0.0
        %794 = vmatprep.subr.mxu0 0.0
        %795 = vmatpush1.msra.mxu0 0.0
        %796 = vmatprep.subr.mxu0 0.0
        %797 = vmatpush1.msra.mxu0 0.0
        %798 = vmatprep.subr.mxu0 0.0
        %799 = vmatpush1.msra.mxu0 0.0
        %800 = vmatprep.mubr.f32.mxu0 0.0
        %801 = vmatmul.mubr.f32.gmra.mrb[0].mxu0 %v712
        %v802 = vpop.f32.mrb[0].mxu0
        %v803 = vadd.f32 %v734, %v802
        %v804 = vpop.f32.mrb[0].mxu0
        %805 = vdwg.mxu0
        %806 = vst [vmem:[%s523] sm:$0xff] %v803
        %s807 = sand.u32 %s239, 1
        %s808 = scalar_lea.sflag [#allocation4], %s807
        %s809 = sand.u32 %s239, 1
        %s810 = smul.addr %s809, 8
        %s811 = scalar_lea.vmem [#allocation14], %s810
        // Predicated region
        $region77: #{_fused_forward.1} parent=47 // pred_check
          %p812 = pneg %p249
        $region78: #{_fused_forward.1} parent=47 // pred_check_branch
          %814 = sbr.rel (%p812) target = $region80
        $region79: #{_fused_forward.1} parent=47 // pred_region
          %s816 = ssub.s32 128, 128
          %817 = vsyncadd %s808, %s816
          %s818 = sadd.s32 %s38, %s37
          %s819 = smul.addr %s818, 128
          %s820 = scalar_lea.hbm %s7, %s819
          %s822 = sshll.u32 %s811, 4
          %s823 = int_to_ptr.vmem [resolvable:$true] %s822
          %825 = dma.vmem_to_hbm [thread:$0]  %s823, 128, %s820, %s808
        $region80: #{_fused_forward.1} parent=47 // pred_fallthru
          _
      $region48: #{_fused_forward.1} parent=5 // pred_fallthru
        _
      %p826 = scmp.le.s32.totalorder 2, %s28
      // Predicated region
      $region81: #{_fused_forward.1} parent=5 // pred_check
        %p827 = pneg %p826
      $region82: #{_fused_forward.1} parent=5 // pred_check_branch
        %829 = sbr.rel (%p827) target = $region84
      $region83: #{_fused_forward.1} parent=5 // pred_region
        %s830 = ssub.s32 %s28, 2
        // Predicated region
        $region85: #{_fused_forward.1} parent=83 // pred_check
          %p831 = pneg %p255
        $region86: #{_fused_forward.1} parent=83 // pred_check_branch
          %833 = sbr.rel (%p831) target = $region88
        $region87: #{_fused_forward.1} parent=83 // pred_region
          %s834 = sand.u32 %s240, 1
          %s835 = scalar_lea.sflag [#allocation4], %s834
          %s836 = sand.u32 %s240, 1
          %s837 = smul.addr %s836, 8
          %s838 = scalar_lea.vmem [#allocation14], %s837
          %839 = dma.done %s835, 128
        $region88: #{_fused_forward.1} parent=83 // pred_fallthru
          _
      $region84: #{_fused_forward.1} parent=5 // pred_fallthru
        _
    $region6: #{_fused_forward.1} parent=1 // loop_footer
      %s32 = sadd.s32 1, %s28
    $region7: #{_fused_forward.1} parent=1 // loop_footer_branch
      %27 = sbr.rel target = $region3
    $region8: #{_fused_forward.1} parent=1 // loop_exit
      _
    %840 = vsyncpa [#allocation3], 1
    %s841 = scalar_lea.sflag [#allocation3], 1
    %842 = vsyncpa %s841, 1
    %843 = vsyncpa [#allocation6], 1
    %s844 = scalar_lea.sflag [#allocation6], 1
    %845 = vsyncpa %s844, 1
    %846 = vsyncpa [#allocation9], 1
    %s847 = scalar_lea.sflag [#allocation9], 1
    %848 = vsyncpa %s847, 1
    %849 = vsyncpa [#allocation12], 1
    %s850 = scalar_lea.sflag [#allocation12], 1
    %851 = vsyncpa %s850, 1
    %852 = vsyncpa [#allocation4], 1
    %s853 = scalar_lea.sflag [#allocation4], 1
    %854 = vsyncpa %s853, 1

</llo_original>
